<compile_context>
chip_gen: v7x
topology: tpu7x:2x2x1
jax: 0.10.0
libtpu: 0.0.40
codegen_flags: <defaults>
</compile_context>

<pallas_src>
import functools

import jax
import jax.numpy as jnp
from jax.experimental import pallas as pl
from jax.experimental.pallas import tpu as pltpu

KERNEL = 3  # conv kernel size, padding = KERNEL // 2 = 1 ("same" conv)


def _round_up(n, m):
    return ((n + m - 1) // m) * m


def _ceil8(n):
    return _round_up(n, 8)


def _convlstm_kernel(x_ref, h_ref, c_ref, w_ref, b_ref, m_ref,
                     newc_ref, newh_ref, pad_ref, col_ref,
                     *, width, halo, cin_p):
    """One grid step = one batch element.

    x_ref : (1, Cin, HWp)  bf16 input (NCHW with H,W flattened -> lanes)
    h_ref : (1, hid, HWp)  bf16 previous hidden state
    c_ref : (1, hid, HWp)  f32  previous cell state
    w_ref : (4*hid, 9*rpt) bf16 flattened conv weight
    b_ref : (4*hid, 1)     f32  conv bias (forget_bias already folded into f rows)
    m_ref : (2, HWp)       bf16 {0,1} masks: row0 zeroes x==0 cols, row1 x==W-1
    newc_ref / newh_ref : (1, hid, HWp) f32 outputs (flattened NCHW)
    pad_ref : (rpt, HWp + 2*halo) bf16 zero-haloed staging buffer (scratch)
    col_ref : (9*rpt, HWp)        bf16 im2col matrix (scratch)
    """
    cin = x_ref.shape[1]
    hid = h_ref.shape[1]
    hw = x_ref.shape[2]                 # padded H*W (multiple of 128)
    rpt = pad_ref.shape[0]              # padded channels per tap (multiple of 16)

    # Zero ONLY the halo columns and the padded channel rows; the interior x/h
    # rows are fully overwritten below.  Re-done every grid step so the kernel
    # stays correct under megacore grid sharding (scratch is per-core and
    # persists across iterations).
    pad_ref[:, 0:halo] = jnp.zeros((rpt, halo), jnp.bfloat16)
    pad_ref[:, halo + hw:2 * halo + hw] = jnp.zeros((rpt, halo), jnp.bfloat16)
    if cin < cin_p:
        pad_ref[cin:cin_p, halo:halo + hw] = jnp.zeros((cin_p - cin, hw), jnp.bfloat16)
    if cin_p + hid < rpt:
        pad_ref[cin_p + hid:rpt, halo:halo + hw] = jnp.zeros(
            (rpt - cin_p - hid, hw), jnp.bfloat16)

    # Stage x and h (already bf16) into the zero-haloed, channel-padded buffer.
    pad_ref[0:cin, halo:halo + hw] = x_ref[0]
    pad_ref[cin_p:cin_p + hid, halo:halo + hw] = h_ref[0]

    padv = pad_ref[...]                    # (rpt, hw + 2*halo) bf16
    not_left = m_ref[0:1, :]               # zero where x == 0      (dx = -1 taps)
    not_right = m_ref[1:2, :]              # zero where x == W - 1  (dx = +1 taps)

    # im2col: 9 spatially shifted copies stacked along the contraction axis.
    # y-out-of-range taps land in the zero halo; x wrap-around is masked out.
    t = 0
    for dy in (-1, 0, 1):
        for dx in (-1, 0, 1):
            start = halo + dy * width + dx
            tap = padv[:, start:start + hw]            # (rpt, hw) bf16
            if dx == -1:
                tap = tap * not_left
            elif dx == 1:
                tap = tap * not_right
            col_ref[t * rpt:(t + 1) * rpt, :] = tap    # 16-sublane / 128-lane aligned
            t += 1

    # Single MXU matmul: (4*hid, 9*rpt) x (9*rpt, HWp), bf16 in / f32 accumulate.
    gates = jnp.dot(w_ref[...], col_ref[...],
                    preferred_element_type=jnp.float32)       # (4*hid, hw) f32
    gates = gates + b_ref[...]                                 # lane-broadcast bias

    # Gate order matches torch.chunk(4, dim=1): i, j, f, o.
    i_g = gates[0 * hid:1 * hid, :]
    j_g = gates[1 * hid:2 * hid, :]
    f_g = gates[2 * hid:3 * hid, :]   # forget_bias already folded into its bias rows
    o_g = gates[3 * hid:4 * hid, :]

    c_prev = c_ref[0]
    new_c = c_prev * jax.nn.sigmoid(f_g) + jax.nn.sigmoid(i_g) * jnp.tanh(j_g)
    new_h = jnp.tanh(new_c) * jax.nn.sigmoid(o_g)

    newc_ref[0] = new_c.astype(newc_ref.dtype)
    newh_ref[0] = new_h.astype(newh_ref.dtype)


def _flatten_weight(weight, cin, hid, cin_p, rpt):
    """(3, 3, Cin+hid, 4*hid) HWIO -> (4*hid, 9*rpt) bf16.

    The Cout axis must already be ordered [i | j | f | o] (torch.chunk order),
    i.e. PyTorch's Gates.weight (Cout, Cin+hid, 3, 3) permuted to HWIO.
    Zero columns are inserted for the channel padding used by the kernel.
    """
    c_out = weight.shape[3]
    w_pad = jnp.zeros((KERNEL, KERNEL, rpt, c_out), weight.dtype)
    w_pad = w_pad.at[:, :, :cin, :].set(weight[:, :, :cin, :])
    w_pad = w_pad.at[:, :, cin_p:cin_p + hid, :].set(weight[:, :, cin:, :])
    w_flat = jnp.transpose(w_pad, (3, 0, 1, 2)).reshape(c_out, KERNEL * KERNEL * rpt)
    return w_flat.astype(jnp.bfloat16)


def prepare_params(weight, bias, *, cin, image_width, hw_padded, forget_bias=1.0):
    """Loop-invariant prep (flattened weight, bias with folded forget_bias,
    lane wrap masks).  In a recurrent time loop call this ONCE and pass the
    result to conv_lstm_cell(..., params=...)."""
    hid = weight.shape[3] // 4
    c_out = 4 * hid
    cin_p = _ceil8(cin)
    rpt = _round_up(cin_p + _ceil8(hid), 16)

    w_flat = _flatten_weight(weight, cin, hid, cin_p, rpt)
    b2 = bias.reshape(c_out, 1).astype(jnp.float32)
    b2 = b2.at[2 * hid:3 * hid].add(jnp.float32(forget_bias))  # fold forget bias (f gate)
    lane_x = jnp.arange(hw_padded, dtype=jnp.int32) % image_width
    masks = jnp.stack([lane_x != 0, lane_x != image_width - 1]).astype(jnp.bfloat16)
    return w_flat, b2, masks


def conv_lstm_cell(x_nchw, prev_state, weight, bias, *, forget_bias=1.0, params=None):
    """ConvLSTMCell.forward.

    x_nchw : (B, Cin, H, W) float32
    prev_state : None or (c, h), each (B, hid, H, W) float32
    weight : (3, 3, Cin+hid, 4*hid) float32  (HWIO, Cout ordered [i|j|f|o])
    bias   : (4*hid,) float32
    Returns (new_h, [new_c, new_h]) in NCHW f32, matching the PyTorch module.
    """
    B, cin, H, W = x_nchw.shape
    c_tot = weight.shape[2]
    hid = weight.shape[3] // 4
    c_out = 4 * hid
    assert weight.shape[3] % 4 == 0
    assert c_tot == cin + hid, "weight input-channel dim must be Cin + hidden"

    hw = H * W
    hw_p = _round_up(hw, 128)            # lane-dense spatial extent
    halo = _round_up(W + 1, 128)         # >= W+1, so dy/dx tap slices never wrap
    cin_p = _ceil8(cin)
    rpt = _round_up(cin_p + _ceil8(hid), 16)   # bf16 packed-tile aligned per-tap stride

    if prev_state is None:
        c = jnp.zeros((B, hid, H, W), jnp.float32)
        h = jnp.zeros((B, hid, H, W), jnp.float32)
    else:
        c, h = prev_state

    # Conv activations in bf16 (MXU inputs; f32 accumulation).  Cell state f32.
    x2 = x_nchw.reshape(B, cin, hw).astype(jnp.bfloat16)
    h2 = h.reshape(B, hid, hw).astype(jnp.bfloat16)
    c2 = c.reshape(B, hid, hw).astype(jnp.float32)
    if hw_p != hw:
        zpad = ((0, 0), (0, 0), (0, hw_p - hw))
        x2 = jnp.pad(x2, zpad)
        h2 = jnp.pad(h2, zpad)
        c2 = jnp.pad(c2, zpad)

    if params is None:
        params = prepare_params(weight, bias, cin=cin, image_width=W,
                                hw_padded=hw_p, forget_bias=forget_bias)
    w_flat, b2, masks = params

    kern = functools.partial(_convlstm_kernel, width=W, halo=halo, cin_p=cin_p)

    # Rough per-step VMEM footprint (double-buffered ins/outs + scratch +
    # f32 intermediates) -> explicit compiler cap with headroom.
    est = (2 * (cin * hw_p * 2) + 2 * (hid * hw_p * 2) + 2 * (hid * hw_p * 4)
           + 2 * (c_out * KERNEL * KERNEL * rpt * 2) + 2 * (c_out * 4)
           + 2 * (2 * hw_p * 2)
           + 2 * 2 * (hid * hw_p * 4)
           + rpt * (hw_p + 2 * halo) * 2 + KERNEL * KERNEL * rpt * hw_p * 2
           + 4 * (c_out * hw_p * 4))
    vmem_limit = int(min(128 << 20, max(32 << 20, 2 * est)))

    new_c2, new_h2 = pl.pallas_call(
        kern,
        out_shape=(
            jax.ShapeDtypeStruct((B, hid, hw_p), jnp.float32),
            jax.ShapeDtypeStruct((B, hid, hw_p), jnp.float32),
        ),
        grid_spec=pltpu.PrefetchScalarGridSpec(
            num_scalar_prefetch=0,
            grid=(B,),
            in_specs=[
                pl.BlockSpec((1, cin, hw_p), lambda b: (b, 0, 0)),
                pl.BlockSpec((1, hid, hw_p), lambda b: (b, 0, 0)),
                pl.BlockSpec((1, hid, hw_p), lambda b: (b, 0, 0)),
                pl.BlockSpec((c_out, KERNEL * KERNEL * rpt), lambda b: (0, 0)),
                pl.BlockSpec((c_out, 1), lambda b: (0, 0)),
                pl.BlockSpec((2, hw_p), lambda b: (0, 0)),
            ],
            out_specs=[
                pl.BlockSpec((1, hid, hw_p), lambda b: (b, 0, 0)),
                pl.BlockSpec((1, hid, hw_p), lambda b: (b, 0, 0)),
            ],
            scratch_shapes=[
                pltpu.VMEM((rpt, hw_p + 2 * halo), jnp.bfloat16),
                pltpu.VMEM((KERNEL * KERNEL * rpt, hw_p), jnp.bfloat16),
            ],
        ),
        compiler_params=pltpu.CompilerParams(
            dimension_semantics=("parallel",),
            vmem_limit_bytes=vmem_limit),
    )(x2, h2, c2, w_flat, b2, masks)

    if hw_p != hw:
        new_c2 = new_c2[:, :, :hw]
        new_h2 = new_h2[:, :, :hw]
    new_c = new_c2.reshape(B, hid, H, W)
    new_h = new_h2.reshape(B, hid, H, W)
    return new_h, [new_c, new_h]


def _reference(x_nchw, prev_state, weight, bias, *, forget_bias=1.0):
    """Pure-JAX reference (lax conv).  Conv inputs are cast to bf16 to match
    the kernel's bf16-input / f32-accumulate MXU matmul; cell math stays f32."""
    B, cin, H, W = x_nchw.shape
    hid = weight.shape[3] // 4
    if prev_state is None:
        c = jnp.zeros((B, hid, H, W), jnp.float32)
        h = jnp.zeros((B, hid, H, W), jnp.float32)
    else:
        c, h = prev_state
    stacked = jnp.concatenate([x_nchw, h], axis=1)
    gates = jax.lax.conv_general_dilated(
        stacked.astype(jnp.bfloat16), weight.astype(jnp.bfloat16),
        window_strides=(1, 1), padding="SAME",
        dimension_numbers=("NCHW", "HWIO", "NCHW"),
        preferred_element_type=jnp.float32,
    ) + bias.reshape(1, -1, 1, 1)
    i, j, f, o = jnp.split(gates, 4, axis=1)
    new_c = c * jax.nn.sigmoid(f + forget_bias) + jax.nn.sigmoid(i) * jnp.tanh(j)
    new_h = jnp.tanh(new_c) * jax.nn.sigmoid(o)
    return new_h, [new_c, new_h]


if __name__ == "__main__":
    # Small shapes consistent with the module's forward.
    B, Cin, H, W = 2, 4, 16, 16
    hidden = 8
    forget_bias = 1.0

    key = jax.random.PRNGKey(0)
    kx, kc, kh_, kw_ = jax.random.split(key, 4)

    x = jax.random.normal(kx, (B, Cin, H, W), jnp.float32)
    c0 = jax.random.normal(kc, (B, hidden, H, W), jnp.float32)
    h0 = jax.random.normal(kh_, (B, hidden, H, W), jnp.float32)

    # Deterministic xavier_uniform_-style init for the Gates conv (bias zero),
    # laid out HWIO with Cout ordered [i|j|f|o] (torch.chunk order).
    c_tot = Cin + hidden
    c_out = 4 * hidden
    fan_in = c_tot * KERNEL * KERNEL
    fan_out = c_out * KERNEL * KERNEL
    bound = (6.0 / (fan_in + fan_out)) ** 0.5
    weight = jax.random.uniform(
        kw_, (KERNEL, KERNEL, c_tot, c_out), jnp.float32,
        minval=-bound, maxval=bound)
    bias = jnp.zeros((c_out,), jnp.float32)

    # Loop-invariant params computed once (how a recurrent time loop should use it).
    hw_p = _round_up(H * W, 128)
    params = prepare_params(weight, bias, cin=Cin, image_width=W,
                            hw_padded=hw_p, forget_bias=forget_bias)

    new_h, (new_c, new_h2) = conv_lstm_cell(
        x, (c0, h0), weight, bias, forget_bias=forget_bias, params=params)
    jax.block_until_ready((new_h, new_c, new_h2))

    # Correctness check.  Tolerance is set by bf16 conv-input rounding plus f32
    # accumulation-order differences between the in-kernel MXU matmul and
    # lax.conv (a layout/indexing bug would produce O(1) errors).
    ref_h, (ref_c, _) = _reference(
        x, (c0, h0), weight, bias, forget_bias=forget_bias)
    assert jnp.allclose(new_h, ref_h, atol=1e-4, rtol=1e-4), "new_h mismatch"
    assert jnp.allclose(new_c, ref_c, atol=1e-4, rtol=1e-4), "new_c mismatch"

    # Also exercise the prev_state=None path (zeros init), like the module.
    out_h0, (out_c0, _) = conv_lstm_cell(x, None, weight, bias,
                                         forget_bias=forget_bias)
    ref_h0, (ref_c0, _) = _reference(x, None, weight, bias,
                                     forget_bias=forget_bias)
    jax.block_until_ready((out_h0, out_c0))
    assert jnp.allclose(out_h0, ref_h0, atol=1e-4, rtol=1e-4), "None-state mismatch"

    print("KERNEL_OK")
</pallas_src>

<mosaic_0001>
module attributes {stable_mosaic.version = 11 : i64} {
  func.func @_convlstm_kernel(%arg0: i32, %arg1: memref<1x4x256xbf16, #tpu.memory_space<vmem>>, %arg2: memref<1x8x256xbf16, #tpu.memory_space<vmem>>, %arg3: memref<1x8x256xf32, #tpu.memory_space<vmem>>, %arg4: memref<32x144xbf16, #tpu.memory_space<vmem>>, %arg5: memref<32x1xf32, #tpu.memory_space<vmem>>, %arg6: memref<2x256xbf16, #tpu.memory_space<vmem>>, %arg7: memref<1x8x256xf32, #tpu.memory_space<vmem>>, %arg8: memref<1x8x256xf32, #tpu.memory_space<vmem>>, %arg9: memref<16x512xbf16, #tpu.memory_space<vmem>>, %arg10: memref<144x256xbf16, #tpu.memory_space<vmem>>) attributes {dimension_semantics = [#tpu.dimension_semantics<parallel>], iteration_bounds = array<i64: 2>, scalar_prefetch = 0 : i64, scratch_operands = 2 : i64, tpu.core_type = #tpu.core_type<tc>, window_params = [{transform_indices = @transform_0, window_bounds = array<i64: 1, 4, 256>}, {transform_indices = @transform_1, window_bounds = array<i64: 1, 8, 256>}, {transform_indices = @transform_2, window_bounds = array<i64: 1, 8, 256>}, {pipeline_mode = #tpu.pipeline_mode<synchronous>, transform_indices = @transform_3, window_bounds = array<i64: 32, 144>}, {pipeline_mode = #tpu.pipeline_mode<synchronous>, transform_indices = @transform_4, window_bounds = array<i64: 32, 1>}, {pipeline_mode = #tpu.pipeline_mode<synchronous>, transform_indices = @transform_5, window_bounds = array<i64: 2, 256>}, {transform_indices = @transform_6, window_bounds = array<i64: 1, 8, 256>}, {transform_indices = @transform_7, window_bounds = array<i64: 1, 8, 256>}]} {
    %cst = arith.constant 0.000000e+00 : bf16
    %0 = vector.broadcast %cst : bf16 to vector<16x128xbf16>
    %c0 = arith.constant 0 : index
    %c0_0 = arith.constant 0 : index
    %1 = vector.load %arg9[%c0, %c0_0] : memref<16x512xbf16, #tpu.memory_space<vmem>>, vector<16x128xbf16>
    tpu.vector_store %arg9[%c0, %c0_0], %0 {strides = array<i32>} : memref<16x512xbf16, #tpu.memory_space<vmem>>, vector<16x128xbf16>,
    %cst_1 = arith.constant 0.000000e+00 : bf16
    %2 = vector.broadcast %cst_1 : bf16 to vector<16x128xbf16>
    %c0_2 = arith.constant 0 : index
    %c384 = arith.constant 384 : index
    %3 = vector.load %arg9[%c0_2, %c384] : memref<16x512xbf16, #tpu.memory_space<vmem>>, vector<16x128xbf16>
    tpu.vector_store %arg9[%c0_2, %c384], %2 {strides = array<i32>} : memref<16x512xbf16, #tpu.memory_space<vmem>>, vector<16x128xbf16>,
    %cst_3 = arith.constant 0.000000e+00 : bf16
    %4 = vector.broadcast %cst_3 : bf16 to vector<4x256xbf16>
    %c4 = arith.constant 4 : index
    %c128 = arith.constant 128 : index
    %5 = vector.load %arg9[%c4, %c128] : memref<16x512xbf16, #tpu.memory_space<vmem>>, vector<4x256xbf16>
    tpu.vector_store %arg9[%c4, %c128], %4 {strides = array<i32>} : memref<16x512xbf16, #tpu.memory_space<vmem>>, vector<4x256xbf16>,
    %c0_4 = arith.constant 0 : index
    %c0_5 = arith.constant 0 : index
    %c0_6 = arith.constant 0 : index
    %6 = vector.load %arg1[%c0_4, %c0_5, %c0_6] : memref<1x4x256xbf16, #tpu.memory_space<vmem>>, vector<1x4x256xbf16>
    %7 = vector.shape_cast %6 : vector<1x4x256xbf16> to vector<4x256xbf16>
    %c0_7 = arith.constant 0 : index
    %c128_8 = arith.constant 128 : index
    %8 = vector.load %arg9[%c0_7, %c128_8] : memref<16x512xbf16, #tpu.memory_space<vmem>>, vector<4x256xbf16>
    tpu.vector_store %arg9[%c0_7, %c128_8], %7 {strides = array<i32>} : memref<16x512xbf16, #tpu.memory_space<vmem>>, vector<4x256xbf16>,
    %c0_9 = arith.constant 0 : index
    %c0_10 = arith.constant 0 : index
    %c0_11 = arith.constant 0 : index
    %9 = vector.load %arg2[%c0_9, %c0_10, %c0_11] : memref<1x8x256xbf16, #tpu.memory_space<vmem>>, vector<1x8x256xbf16>
    %10 = vector.shape_cast %9 : vector<1x8x256xbf16> to vector<8x256xbf16>
    %c8 = arith.constant 8 : index
    %c128_12 = arith.constant 128 : index
    %11 = vector.load %arg9[%c8, %c128_12] : memref<16x512xbf16, #tpu.memory_space<vmem>>, vector<8x256xbf16>
    tpu.vector_store %arg9[%c8, %c128_12], %10 {strides = array<i32>} : memref<16x512xbf16, #tpu.memory_space<vmem>>, vector<8x256xbf16>,
    %c0_13 = arith.constant 0 : index
    %c0_14 = arith.constant 0 : index
    %12 = vector.load %arg9[%c0_13, %c0_14] : memref<16x512xbf16, #tpu.memory_space<vmem>>, vector<16x512xbf16>
    %c0_15 = arith.constant 0 : index
    %c0_16 = arith.constant 0 : index
    %13 = vector.load %arg6[%c0_15, %c0_16] : memref<2x256xbf16, #tpu.memory_space<vmem>>, vector<1x256xbf16>
    %c1 = arith.constant 1 : index
    %c0_17 = arith.constant 0 : index
    %14 = vector.load %arg6[%c1, %c0_17] : memref<2x256xbf16, #tpu.memory_space<vmem>>, vector<1x256xbf16>
    %15 = vector.extract_strided_slice %12 {offsets = [0, 111], sizes = [16, 256], strides = [1, 1]} : vector<16x512xbf16> to vector<16x256xbf16>
    %16 = vector.broadcast %13 : vector<1x256xbf16> to vector<16x256xbf16>
    %17 = arith.mulf %15, %16 : vector<16x256xbf16>
    %c0_18 = arith.constant 0 : index
    %c0_19 = arith.constant 0 : index
    %18 = vector.load %arg10[%c0_18, %c0_19] : memref<144x256xbf16, #tpu.memory_space<vmem>>, vector<16x256xbf16>
    tpu.vector_store %arg10[%c0_18, %c0_19], %17 {strides = array<i32>} : memref<144x256xbf16, #tpu.memory_space<vmem>>, vector<16x256xbf16>,
    %19 = vector.extract_strided_slice %12 {offsets = [0, 112], sizes = [16, 256], strides = [1, 1]} : vector<16x512xbf16> to vector<16x256xbf16>
    %c16 = arith.constant 16 : index
    %c0_20 = arith.constant 0 : index
    %20 = vector.load %arg10[%c16, %c0_20] : memref<144x256xbf16, #tpu.memory_space<vmem>>, vector<16x256xbf16>
    tpu.vector_store %arg10[%c16, %c0_20], %19 {strides = array<i32>} : memref<144x256xbf16, #tpu.memory_space<vmem>>, vector<16x256xbf16>,
    %21 = vector.extract_strided_slice %12 {offsets = [0, 113], sizes = [16, 256], strides = [1, 1]} : vector<16x512xbf16> to vector<16x256xbf16>
    %22 = vector.broadcast %14 : vector<1x256xbf16> to vector<16x256xbf16>
    %23 = arith.mulf %21, %22 : vector<16x256xbf16>
    %c32 = arith.constant 32 : index
    %c0_21 = arith.constant 0 : index
    %24 = vector.load %arg10[%c32, %c0_21] : memref<144x256xbf16, #tpu.memory_space<vmem>>, vector<16x256xbf16>
    tpu.vector_store %arg10[%c32, %c0_21], %23 {strides = array<i32>} : memref<144x256xbf16, #tpu.memory_space<vmem>>, vector<16x256xbf16>,
    %25 = vector.extract_strided_slice %12 {offsets = [0, 127], sizes = [16, 256], strides = [1, 1]} : vector<16x512xbf16> to vector<16x256xbf16>
    %26 = vector.broadcast %13 : vector<1x256xbf16> to vector<16x256xbf16>
    %27 = arith.mulf %25, %26 : vector<16x256xbf16>
    %c48 = arith.constant 48 : index
    %c0_22 = arith.constant 0 : index
    %28 = vector.load %arg10[%c48, %c0_22] : memref<144x256xbf16, #tpu.memory_space<vmem>>, vector<16x256xbf16>
    tpu.vector_store %arg10[%c48, %c0_22], %27 {strides = array<i32>} : memref<144x256xbf16, #tpu.memory_space<vmem>>, vector<16x256xbf16>,
    %29 = vector.extract_strided_slice %12 {offsets = [0, 128], sizes = [16, 256], strides = [1, 1]} : vector<16x512xbf16> to vector<16x256xbf16>
    %c64 = arith.constant 64 : index
    %c0_23 = arith.constant 0 : index
    %30 = vector.load %arg10[%c64, %c0_23] : memref<144x256xbf16, #tpu.memory_space<vmem>>, vector<16x256xbf16>
    tpu.vector_store %arg10[%c64, %c0_23], %29 {strides = array<i32>} : memref<144x256xbf16, #tpu.memory_space<vmem>>, vector<16x256xbf16>,
    %31 = vector.extract_strided_slice %12 {offsets = [0, 129], sizes = [16, 256], strides = [1, 1]} : vector<16x512xbf16> to vector<16x256xbf16>
    %32 = vector.broadcast %14 : vector<1x256xbf16> to vector<16x256xbf16>
    %33 = arith.mulf %31, %32 : vector<16x256xbf16>
    %c80 = arith.constant 80 : index
    %c0_24 = arith.constant 0 : index
    %34 = vector.load %arg10[%c80, %c0_24] : memref<144x256xbf16, #tpu.memory_space<vmem>>, vector<16x256xbf16>
    tpu.vector_store %arg10[%c80, %c0_24], %33 {strides = array<i32>} : memref<144x256xbf16, #tpu.memory_space<vmem>>, vector<16x256xbf16>,
    %35 = vector.extract_strided_slice %12 {offsets = [0, 143], sizes = [16, 256], strides = [1, 1]} : vector<16x512xbf16> to vector<16x256xbf16>
    %36 = vector.broadcast %13 : vector<1x256xbf16> to vector<16x256xbf16>
    %37 = arith.mulf %35, %36 : vector<16x256xbf16>
    %c96 = arith.constant 96 : index
    %c0_25 = arith.constant 0 : index
    %38 = vector.load %arg10[%c96, %c0_25] : memref<144x256xbf16, #tpu.memory_space<vmem>>, vector<16x256xbf16>
    tpu.vector_store %arg10[%c96, %c0_25], %37 {strides = array<i32>} : memref<144x256xbf16, #tpu.memory_space<vmem>>, vector<16x256xbf16>,
    %39 = vector.extract_strided_slice %12 {offsets = [0, 144], sizes = [16, 256], strides = [1, 1]} : vector<16x512xbf16> to vector<16x256xbf16>
    %c112 = arith.constant 112 : index
    %c0_26 = arith.constant 0 : index
    %40 = vector.load %arg10[%c112, %c0_26] : memref<144x256xbf16, #tpu.memory_space<vmem>>, vector<16x256xbf16>
    tpu.vector_store %arg10[%c112, %c0_26], %39 {strides = array<i32>} : memref<144x256xbf16, #tpu.memory_space<vmem>>, vector<16x256xbf16>,
    %41 = vector.extract_strided_slice %12 {offsets = [0, 145], sizes = [16, 256], strides = [1, 1]} : vector<16x512xbf16> to vector<16x256xbf16>
    %42 = vector.broadcast %14 : vector<1x256xbf16> to vector<16x256xbf16>
    %43 = arith.mulf %41, %42 : vector<16x256xbf16>
    %c128_27 = arith.constant 128 : index
    %c0_28 = arith.constant 0 : index
    %44 = vector.load %arg10[%c128_27, %c0_28] : memref<144x256xbf16, #tpu.memory_space<vmem>>, vector<16x256xbf16>
    tpu.vector_store %arg10[%c128_27, %c0_28], %43 {strides = array<i32>} : memref<144x256xbf16, #tpu.memory_space<vmem>>, vector<16x256xbf16>,
    %c0_29 = arith.constant 0 : index
    %c0_30 = arith.constant 0 : index
    %45 = vector.load %arg4[%c0_29, %c0_30] : memref<32x144xbf16, #tpu.memory_space<vmem>>, vector<32x144xbf16>
    %c0_31 = arith.constant 0 : index
    %c0_32 = arith.constant 0 : index
    %46 = vector.load %arg10[%c0_31, %c0_32] : memref<144x256xbf16, #tpu.memory_space<vmem>>, vector<144x256xbf16>
    %cst_33 = arith.constant dense<0.000000e+00> : vector<32x256xf32>
    %47 = tpu.matmul %45, %46, %cst_33 {dimension_numbers = #tpu.dot_dimension_numbers<[1], [0], [0], [1], [0, 0, 1, 1], [], []>} : vector<32x144xbf16>, vector<144x256xbf16>, vector<32x256xf32> -> vector<32x256xf32>
    %c0_34 = arith.constant 0 : index
    %c0_35 = arith.constant 0 : index
    %48 = vector.load %arg5[%c0_34, %c0_35] : memref<32x1xf32, #tpu.memory_space<vmem>>, vector<32x1xf32>
    %49 = vector.broadcast %48 : vector<32x1xf32> to vector<32x256xf32>
    %50 = arith.addf %47, %49 : vector<32x256xf32>
    %51 = vector.extract_strided_slice %50 {offsets = [0, 0], sizes = [8, 256], strides = [1, 1]} : vector<32x256xf32> to vector<8x256xf32>
    %52 = vector.extract_strided_slice %50 {offsets = [8, 0], sizes = [8, 256], strides = [1, 1]} : vector<32x256xf32> to vector<8x256xf32>
    %53 = vector.extract_strided_slice %50 {offsets = [16, 0], sizes = [8, 256], strides = [1, 1]} : vector<32x256xf32> to vector<8x256xf32>
    %54 = vector.extract_strided_slice %50 {offsets = [24, 0], sizes = [8, 256], strides = [1, 1]} : vector<32x256xf32> to vector<8x256xf32>
    %c0_36 = arith.constant 0 : index
    %c0_37 = arith.constant 0 : index
    %c0_38 = arith.constant 0 : index
    %55 = vector.load %arg3[%c0_36, %c0_37, %c0_38] : memref<1x8x256xf32, #tpu.memory_space<vmem>>, vector<1x8x256xf32>
    %56 = vector.shape_cast %55 : vector<1x8x256xf32> to vector<8x256xf32>
    %57 = arith.negf %53 : vector<8x256xf32>
    %58 = math.exp %57 : vector<8x256xf32>
    %cst_39 = arith.constant 1.000000e+00 : f32
    %59 = vector.broadcast %cst_39 : f32 to vector<8x256xf32>
    %60 = arith.addf %59, %58 : vector<8x256xf32>
    %61 = arith.divf %59, %60 : vector<8x256xf32>
    %62 = arith.mulf %56, %61 : vector<8x256xf32>
    %63 = arith.negf %51 : vector<8x256xf32>
    %64 = math.exp %63 : vector<8x256xf32>
    %cst_40 = arith.constant 1.000000e+00 : f32
    %65 = vector.broadcast %cst_40 : f32 to vector<8x256xf32>
    %66 = arith.addf %65, %64 : vector<8x256xf32>
    %67 = arith.divf %65, %66 : vector<8x256xf32>
    %68 = math.tanh %52 : vector<8x256xf32>
    %69 = arith.mulf %67, %68 : vector<8x256xf32>
    %70 = arith.addf %62, %69 : vector<8x256xf32>
    %71 = math.tanh %70 : vector<8x256xf32>
    %72 = arith.negf %54 : vector<8x256xf32>
    %73 = math.exp %72 : vector<8x256xf32>
    %cst_41 = arith.constant 1.000000e+00 : f32
    %74 = vector.broadcast %cst_41 : f32 to vector<8x256xf32>
    %75 = arith.addf %74, %73 : vector<8x256xf32>
    %76 = arith.divf %74, %75 : vector<8x256xf32>
    %77 = arith.mulf %71, %76 : vector<8x256xf32>
    %c0_42 = arith.constant 0 : index
    %c0_43 = arith.constant 0 : index
    %c0_44 = arith.constant 0 : index
    %78 = vector.load %arg7[%c0_42, %c0_43, %c0_44] : memref<1x8x256xf32, #tpu.memory_space<vmem>>, vector<1x8x256xf32>
    %79 = vector.shape_cast %78 : vector<1x8x256xf32> to vector<8x256xf32>
    %80 = vector.shape_cast %70 : vector<8x256xf32> to vector<1x8x256xf32>
    tpu.vector_store %arg7[%c0_42, %c0_43, %c0_44], %80 {strides = array<i32>} : memref<1x8x256xf32, #tpu.memory_space<vmem>>, vector<1x8x256xf32>,
    %c0_45 = arith.constant 0 : index
    %c0_46 = arith.constant 0 : index
    %c0_47 = arith.constant 0 : index
    %81 = vector.load %arg8[%c0_45, %c0_46, %c0_47] : memref<1x8x256xf32, #tpu.memory_space<vmem>>, vector<1x8x256xf32>
    %82 = vector.shape_cast %81 : vector<1x8x256xf32> to vector<8x256xf32>
    %83 = vector.shape_cast %77 : vector<8x256xf32> to vector<1x8x256xf32>
    tpu.vector_store %arg8[%c0_45, %c0_46, %c0_47], %83 {strides = array<i32>} : memref<1x8x256xf32, #tpu.memory_space<vmem>>, vector<1x8x256xf32>,
    return
  }
  func.func @transform_0(%arg0: i32) -> (i32, i32, i32) {
    %c0_i32 = arith.constant 0 : i32
    %c0_i32_0 = arith.constant 0 : i32
    %c0_i32_1 = arith.constant 0 : i32
    return %arg0, %c0_i32, %c0_i32_0 : i32, i32, i32
  }
  func.func @transform_1(%arg0: i32) -> (i32, i32, i32) {
    %c0_i32 = arith.constant 0 : i32
    %c0_i32_0 = arith.constant 0 : i32
    %c0_i32_1 = arith.constant 0 : i32
    return %arg0, %c0_i32, %c0_i32_0 : i32, i32, i32
  }
  func.func @transform_2(%arg0: i32) -> (i32, i32, i32) {
    %c0_i32 = arith.constant 0 : i32
    %c0_i32_0 = arith.constant 0 : i32
    %c0_i32_1 = arith.constant 0 : i32
    return %arg0, %c0_i32, %c0_i32_0 : i32, i32, i32
  }
  func.func @transform_3(%arg0: i32) -> (i32, i32) {
    %c0_i32 = arith.constant 0 : i32
    %c0_i32_0 = arith.constant 0 : i32
    %c0_i32_1 = arith.constant 0 : i32
    return %c0_i32, %c0_i32_0 : i32, i32
  }
  func.func @transform_4(%arg0: i32) -> (i32, i32) {
    %c0_i32 = arith.constant 0 : i32
    %c0_i32_0 = arith.constant 0 : i32
    %c0_i32_1 = arith.constant 0 : i32
    return %c0_i32, %c0_i32_0 : i32, i32
  }
  func.func @transform_5(%arg0: i32) -> (i32, i32) {
    %c0_i32 = arith.constant 0 : i32
    %c0_i32_0 = arith.constant 0 : i32
    %c0_i32_1 = arith.constant 0 : i32
    return %c0_i32, %c0_i32_0 : i32, i32
  }
  func.func @transform_6(%arg0: i32) -> (i32, i32, i32) {
    %c0_i32 = arith.constant 0 : i32
    %c0_i32_0 = arith.constant 0 : i32
    %c0_i32_1 = arith.constant 0 : i32
    return %arg0, %c0_i32, %c0_i32_0 : i32, i32, i32
  }
  func.func @transform_7(%arg0: i32) -> (i32, i32, i32) {
    %c0_i32 = arith.constant 0 : i32
    %c0_i32_0 = arith.constant 0 : i32
    %c0_i32_1 = arith.constant 0 : i32
    return %arg0, %c0_i32, %c0_i32_0 : i32, i32, i32
  }
}

</mosaic_0001>

<llo_original>
// kernel: tpu_custom_call.1
$region0: #{tpu_custom_call.1}
  #allocation0 [shape = 'u32[]', space=smem, size = 0x4, offset = 0x4, fixed_abs, tag = 'smem constant byte address 0x4 - core index']
  #allocation1 [shape = 'u32[144,128]{1,0:T(1,128)}', space=vmem, size = 0x12000, scoped, tag = 'internal scratch']
  #allocation2 [shape = 'bf16[16,512]{1,0:T(16,128)(2,1)}', space=vmem, size = 0x4000, scoped, tag = 'scratch operand']
  #allocation3 [shape = 'bf16[144,256]{1,0:T(16,128)(2,1)}', space=vmem, size = 0x12000, scoped, tag = 'scratch operand']
  %s0 = inlined_call_operand.vmem [shape: bf16[2,4,256], index: 0, kind: input, shape index: {}]
  %s1 = inlined_call_operand.hbm [shape: bf16[2,8,256], index: 1, kind: input, shape index: {}]
  %s2 = inlined_call_operand.vmem [shape: f32[2,8,256], index: 2, kind: input, shape index: {}]
  %s3 = inlined_call_operand.hbm [shape: bf16[32,144], index: 3, kind: input, shape index: {}]
  %s4 = inlined_call_operand.vmem [shape: f32[32,1], index: 4, kind: input, shape index: {}]
  %s5 = inlined_call_operand.vmem [shape: bf16[2,256], index: 5, kind: input, shape index: {}]
  %s6 = inlined_call_operand.hbm [shape: f32[2,8,256], index: 6, kind: output, shape index: {0}]
  %s7 = inlined_call_operand.hbm [shape: f32[2,8,256], index: 7, kind: output, shape index: {1}]
  %8 = xla_tuple %s6, %s7
  %s9 = sld [smem:[#allocation0]]
  $region73: #{tpu_custom_call.1} parent=0
    _
  %s11 = ssub.s32 1, %s9
  %s12 = scalar_select 0, %s11, %s9
  $region1: #{tpu_custom_call.1} parent=0
    #allocation4 [shape = 'u8[8192]{0}', space=vmem, size = 0x2000, scoped, tag = 'input window, operand 1']
    #allocation5 [shape = 's32[2]{0}', space=sflag, size = 0x8, scoped, tag = 'scoped memory for tpu_custom_call.1']
    #allocation6 [shape = 's32[2]{0}', space=sflag, size = 0x8, scoped, tag = 'scoped memory for tpu_custom_call.1']
    #allocation7 [shape = 'u8[16384]{0}', space=vmem, size = 0x4000, scoped, tag = 'input window, operand 3, single buffered']
    #allocation8 [shape = 's32[1]{0}', space=sflag, size = 0x4, scoped, tag = 'scoped memory for tpu_custom_call.1']
    #allocation9 [shape = 'u8[16384]{0}', space=vmem, size = 0x4000, scoped, tag = 'output window, operand 0']
    #allocation10 [shape = 'u8[16384]{0}', space=vmem, size = 0x4000, scoped, tag = 'output window, operand 1']
    #allocation11 [shape = 's32[2]{0}', space=sflag, size = 0x8, scoped, tag = 'scoped memory for tpu_custom_call.1']
    %13 = vsyncpa [#allocation5], 0
    %s14 = scalar_lea.sflag [#allocation5], 1
    %15 = vsyncpa %s14, 0
    %16 = vsyncpa [#allocation8], 0
    %17 = vsyncpa [#allocation6], 0
    %s18 = scalar_lea.sflag [#allocation6], 1
    %19 = vsyncpa %s18, 0
    %20 = vsyncpa [#allocation11], 0
    %s21 = scalar_lea.sflag [#allocation11], 1
    %22 = vsyncpa %s21, 0
    loop: start=0, step=1, limit=4
    $region2: #{tpu_custom_call.1} parent=1 // loop_pre_header
      _
    $region3: #{tpu_custom_call.1} parent=1 // loop_header
      %s24 = sphi 0, %s28
      %p25 = scmp.ge.s32.totalorder %s24, 4
      %s34 = sphi 0, %s36
      %s37 = sphi 0, %s34
      %s38 = sphi 0, %s37
      %s54 = sphi 0, %s38
      %s60 = sphi 0, %s62
      %s63 = sphi 0, %s60
      %s64 = sphi 0, %s63
      %s80 = sphi 0, %s64
      %s86 = sphi 0, %s88
      %s89 = sphi 0, %s86
      %s90 = sphi 0, %s89
      %s106 = sphi 0, %s90
      %s110 = sphi 0, %s110
      %s112 = sphi 0, %s110
      %s113 = sphi 0, %s112
      %s127 = sphi 0, %s113
      %s131 = sphi 0, %s131
      %s133 = sphi 0, %s131
      %s134 = sphi 0, %s133
      %s148 = sphi 0, %s134
      %s152 = sphi 0, %s152
      %s154 = sphi 0, %s152
      %s155 = sphi 0, %s154
      %s169 = sphi 0, %s155
      %s175 = sphi 0, %s177
      %s178 = sphi 0, %s175
      %s179 = sphi 0, %s178
      %s195 = sphi 0, %s179
      %s201 = sphi 0, %s203
      %s204 = sphi 0, %s201
      %s205 = sphi 0, %s204
      %s221 = sphi 0, %s205
    $region4: #{tpu_custom_call.1} parent=1 // loop_header_branch
      %27 = sbr.rel (%p25) target = $region8
    $region5: #{tpu_custom_call.1} parent=1 // loop_body
      %s29 = ssub.s32 %s24, 1
      %s30 = ssub.s32 %s24, 2
      %s31 = sadd.s32 %s24, 1
      %s32 = ssub.s32 %s24, %s31
      %p33 = scmp.eq.s32.totalorder %s32, 0
      %s35 = sadd.s32 %s34, 1
      %s36 = scalar_select %p33, %s34, %s35
      %p39 = pneg %p33
      %p40 = scmp.eq.s32.totalorder %s24, 1
      %p41 = por %p39, %p40
      %p42 = scmp.ne.s32.totalorder %s34, %s37
      %p43 = scmp.eq.s32.totalorder %s24, 0
      %p44 = por %p42, %p43
      %p45 = scmp.ne.s32.totalorder %s34, %s37
      %p46 = scmp.eq.s32.totalorder %s29, 1
      %p47 = por %p45, %p46
      %p48 = scmp.ne.s32.totalorder %s37, %s38
      %p49 = scmp.eq.s32.totalorder %s29, 0
      %p50 = por %p48, %p49
      %p51 = scmp.ne.s32.totalorder %s37, %s38
      %p52 = scmp.eq.s32.totalorder %s30, 1
      %p53 = por %p51, %p52
      %p55 = scmp.ne.s32.totalorder %s38, %s54
      %p56 = scmp.eq.s32.totalorder %s30, 0
      %p57 = por %p55, %p56
      %s58 = ssub.s32 %s24, %s31
      %p59 = scmp.eq.s32.totalorder %s58, 0
      %s61 = sadd.s32 %s60, 1
      %s62 = scalar_select %p59, %s60, %s61
      %p65 = pneg %p59
      %p66 = scmp.eq.s32.totalorder %s24, 1
      %p67 = por %p65, %p66
      %p68 = scmp.ne.s32.totalorder %s60, %s63
      %p69 = scmp.eq.s32.totalorder %s24, 0
      %p70 = por %p68, %p69
      %p71 = scmp.ne.s32.totalorder %s60, %s63
      %p72 = scmp.eq.s32.totalorder %s29, 1
      %p73 = por %p71, %p72
      %p74 = scmp.ne.s32.totalorder %s63, %s64
      %p75 = scmp.eq.s32.totalorder %s29, 0
      %p76 = por %p74, %p75
      %p77 = scmp.ne.s32.totalorder %s63, %s64
      %p78 = scmp.eq.s32.totalorder %s30, 1
      %p79 = por %p77, %p78
      %p81 = scmp.ne.s32.totalorder %s64, %s80
      %p82 = scmp.eq.s32.totalorder %s30, 0
      %p83 = por %p81, %p82
      %s84 = ssub.s32 %s24, %s31
      %p85 = scmp.eq.s32.totalorder %s84, 0
      %s87 = sadd.s32 %s86, 1
      %s88 = scalar_select %p85, %s86, %s87
      %p91 = pneg %p85
      %p92 = scmp.eq.s32.totalorder %s24, 1
      %p93 = por %p91, %p92
      %p94 = scmp.ne.s32.totalorder %s86, %s89
      %p95 = scmp.eq.s32.totalorder %s24, 0
      %p96 = por %p94, %p95
      %p97 = scmp.ne.s32.totalorder %s86, %s89
      %p98 = scmp.eq.s32.totalorder %s29, 1
      %p99 = por %p97, %p98
      %p100 = scmp.ne.s32.totalorder %s89, %s90
      %p101 = scmp.eq.s32.totalorder %s29, 0
      %p102 = por %p100, %p101
      %p103 = scmp.ne.s32.totalorder %s89, %s90
      %p104 = scmp.eq.s32.totalorder %s30, 1
      %p105 = por %p103, %p104
      %p107 = scmp.ne.s32.totalorder %s90, %s106
      %p108 = scmp.eq.s32.totalorder %s30, 0
      %p109 = por %p107, %p108
      %s111 = sadd.s32 %s110, 1
      %p114 = scmp.eq.s32.totalorder %s24, 1
      %p115 = scmp.ne.s32.totalorder %s110, %s112
      %p116 = scmp.eq.s32.totalorder %s24, 0
      %p117 = por %p115, %p116
      %p118 = scmp.ne.s32.totalorder %s110, %s112
      %p119 = scmp.eq.s32.totalorder %s29, 1
      %p120 = por %p118, %p119
      %p121 = scmp.ne.s32.totalorder %s112, %s113
      %p122 = scmp.eq.s32.totalorder %s29, 0
      %p123 = por %p121, %p122
      %p124 = scmp.ne.s32.totalorder %s112, %s113
      %p125 = scmp.eq.s32.totalorder %s30, 1
      %p126 = por %p124, %p125
      %p128 = scmp.ne.s32.totalorder %s113, %s127
      %p129 = scmp.eq.s32.totalorder %s30, 0
      %p130 = por %p128, %p129
      %s132 = sadd.s32 %s131, 1
      %p135 = scmp.eq.s32.totalorder %s24, 1
      %p136 = scmp.ne.s32.totalorder %s131, %s133
      %p137 = scmp.eq.s32.totalorder %s24, 0
      %p138 = por %p136, %p137
      %p139 = scmp.ne.s32.totalorder %s131, %s133
      %p140 = scmp.eq.s32.totalorder %s29, 1
      %p141 = por %p139, %p140
      %p142 = scmp.ne.s32.totalorder %s133, %s134
      %p143 = scmp.eq.s32.totalorder %s29, 0
      %p144 = por %p142, %p143
      %p145 = scmp.ne.s32.totalorder %s133, %s134
      %p146 = scmp.eq.s32.totalorder %s30, 1
      %p147 = por %p145, %p146
      %p149 = scmp.ne.s32.totalorder %s134, %s148
      %p150 = scmp.eq.s32.totalorder %s30, 0
      %p151 = por %p149, %p150
      %s153 = sadd.s32 %s152, 1
      %p156 = scmp.eq.s32.totalorder %s24, 1
      %p157 = scmp.ne.s32.totalorder %s152, %s154
      %p158 = scmp.eq.s32.totalorder %s24, 0
      %p159 = por %p157, %p158
      %p160 = scmp.ne.s32.totalorder %s152, %s154
      %p161 = scmp.eq.s32.totalorder %s29, 1
      %p162 = por %p160, %p161
      %p163 = scmp.ne.s32.totalorder %s154, %s155
      %p164 = scmp.eq.s32.totalorder %s29, 0
      %p165 = por %p163, %p164
      %p166 = scmp.ne.s32.totalorder %s154, %s155
      %p167 = scmp.eq.s32.totalorder %s30, 1
      %p168 = por %p166, %p167
      %p170 = scmp.ne.s32.totalorder %s155, %s169
      %p171 = scmp.eq.s32.totalorder %s30, 0
      %p172 = por %p170, %p171
      %s173 = ssub.s32 %s24, %s31
      %p174 = scmp.eq.s32.totalorder %s173, 0
      %s176 = sadd.s32 %s175, 1
      %s177 = scalar_select %p174, %s175, %s176
      %p180 = pneg %p174
      %p181 = scmp.eq.s32.totalorder %s24, 1
      %p182 = por %p180, %p181
      %p183 = scmp.ne.s32.totalorder %s175, %s178
      %p184 = scmp.eq.s32.totalorder %s24, 0
      %p185 = por %p183, %p184
      %p186 = scmp.ne.s32.totalorder %s175, %s178
      %p187 = scmp.eq.s32.totalorder %s29, 1
      %p188 = por %p186, %p187
      %p189 = scmp.ne.s32.totalorder %s178, %s179
      %p190 = scmp.eq.s32.totalorder %s29, 0
      %p191 = por %p189, %p190
      %p192 = scmp.ne.s32.totalorder %s178, %s179
      %p193 = scmp.eq.s32.totalorder %s30, 1
      %p194 = por %p192, %p193
      %p196 = scmp.ne.s32.totalorder %s179, %s195
      %p197 = scmp.eq.s32.totalorder %s30, 0
      %p198 = por %p196, %p197
      %s199 = ssub.s32 %s24, %s31
      %p200 = scmp.eq.s32.totalorder %s199, 0
      %s202 = sadd.s32 %s201, 1
      %s203 = scalar_select %p200, %s201, %s202
      %p206 = pneg %p200
      %p207 = scmp.eq.s32.totalorder %s24, 1
      %p208 = por %p206, %p207
      %p209 = scmp.ne.s32.totalorder %s201, %s204
      %p210 = scmp.eq.s32.totalorder %s24, 0
      %p211 = por %p209, %p210
      %p212 = scmp.ne.s32.totalorder %s201, %s204
      %p213 = scmp.eq.s32.totalorder %s29, 1
      %p214 = por %p212, %p213
      %p215 = scmp.ne.s32.totalorder %s204, %s205
      %p216 = scmp.eq.s32.totalorder %s29, 0
      %p217 = por %p215, %p216
      %p218 = scmp.ne.s32.totalorder %s204, %s205
      %p219 = scmp.eq.s32.totalorder %s30, 1
      %p220 = por %p218, %p219
      %p222 = scmp.ne.s32.totalorder %s205, %s221
      %p223 = scmp.eq.s32.totalorder %s30, 0
      %p224 = por %p222, %p223
      %p225 = scmp.le.s32.totalorder 1, %s24
      %p226 = scmp.lt.s32.totalorder %s24, 3
      %p227 = pnand %p225, %p226
      %p228 = pneg %p227
      // Predicated region
      $region9: #{tpu_custom_call.1} parent=5 // pred_check
        _
      $region10: #{tpu_custom_call.1} parent=5 // pred_check_branch
        %230 = sbr.rel (%p227) target = $region12
      $region11: #{tpu_custom_call.1} parent=5 // pred_region
        %s231 = ssub.s32 %s24, 1
        // Predicated region
        $region13: #{tpu_custom_call.1} parent=11 // pred_check
          %p232 = pneg %p123
        $region14: #{tpu_custom_call.1} parent=11 // pred_check_branch
          %234 = sbr.rel (%p232) target = $region16
        $region15: #{tpu_custom_call.1} parent=11 // pred_region
          %s236 = ssub.s32 512, 512
          %237 = vsyncadd [#allocation8], %s236
          %s238 = sshll.u32 [#allocation7], 4
          %s239 = int_to_ptr.vmem [resolvable:$true] %s238
          %244 = dma.hbm_to_vmem [thread:$0]  %s3, 512, %s239, [#allocation8], 128, 128, 8
        $region16: #{tpu_custom_call.1} parent=11 // pred_fallthru
          _
        // Predicated region
        $region17: #{tpu_custom_call.1} parent=11 // pred_check
          %p245 = pneg %p144
        $region18: #{tpu_custom_call.1} parent=11 // pred_check_branch
          %247 = sbr.rel (%p245) target = $region20
        $region19: #{tpu_custom_call.1} parent=11 // pred_region
          _
        $region20: #{tpu_custom_call.1} parent=11 // pred_fallthru
          _
        // Predicated region
        $region21: #{tpu_custom_call.1} parent=11 // pred_check
          %p248 = pneg %p165
        $region22: #{tpu_custom_call.1} parent=11 // pred_check_branch
          %250 = sbr.rel (%p248) target = $region24
        $region23: #{tpu_custom_call.1} parent=11 // pred_region
          _
        $region24: #{tpu_custom_call.1} parent=11 // pred_fallthru
          _
      $region12: #{tpu_custom_call.1} parent=5 // pred_fallthru
        _
      %p251 = scmp.lt.s32.totalorder %s24, 2
      // Predicated region
      $region25: #{tpu_custom_call.1} parent=5 // pred_check
        %p252 = pneg %p251
      $region26: #{tpu_custom_call.1} parent=5 // pred_check_branch
        %254 = sbr.rel (%p252) target = $region28
      $region27: #{tpu_custom_call.1} parent=5 // pred_region
        // Predicated region
        $region29: #{tpu_custom_call.1} parent=27 // pred_check
          %p255 = pneg %p44
        $region30: #{tpu_custom_call.1} parent=27 // pred_check_branch
          %257 = sbr.rel (%p255) target = $region32
        $region31: #{tpu_custom_call.1} parent=27 // pred_region
          %p258 = scmp.lt.s32.totalorder %s24, 1
          %s259 = scalar_select %p258, %s24, 1
          %s260 = smul.addr %s259, 2
          %s261 = smul.addr %s260, 2
          %s262 = scalar_lea.vmem %s0, %s261
        $region32: #{tpu_custom_call.1} parent=27 // pred_fallthru
          _
        // Predicated region
        $region33: #{tpu_custom_call.1} parent=27 // pred_check
          %p263 = pneg %p70
        $region34: #{tpu_custom_call.1} parent=27 // pred_check_branch
          %265 = sbr.rel (%p263) target = $region36
        $region35: #{tpu_custom_call.1} parent=27 // pred_region
          %s266 = sand.u32 %s60, 1
          %s267 = scalar_lea.sflag [#allocation5], %s266
          %s268 = sand.u32 %s60, 1
          %s269 = smul.addr %s268, 8
          %s270 = scalar_lea.vmem [#allocation4], %s269
          %s272 = ssub.s32 128, 128
          %273 = vsyncadd %s267, %s272
          %s274 = smul.addr %s24, 2
          %s275 = smul.addr %s274, 64
          %s276 = scalar_lea.hbm %s1, %s275
          %s278 = sshll.u32 %s270, 4
          %s279 = int_to_ptr.vmem [resolvable:$true] %s278
          %281 = dma.hbm_to_vmem [thread:$0]  %s276, 128, %s279, %s267
        $region36: #{tpu_custom_call.1} parent=27 // pred_fallthru
          _
        // Predicated region
        $region37: #{tpu_custom_call.1} parent=27 // pred_check
          %p282 = pneg %p96
        $region38: #{tpu_custom_call.1} parent=27 // pred_check_branch
          %284 = sbr.rel (%p282) target = $region40
        $region39: #{tpu_custom_call.1} parent=27 // pred_region
          %p285 = scmp.lt.s32.totalorder %s24, 1
          %s286 = scalar_select %p285, %s24, 1
          %s287 = smul.addr %s286, 2
          %s288 = smul.addr %s287, 8
          %s289 = scalar_lea.vmem %s2, %s288
        $region40: #{tpu_custom_call.1} parent=27 // pred_fallthru
          _
      $region28: #{tpu_custom_call.1} parent=5 // pred_fallthru
        _
      %p290 = scmp.le.s32.totalorder 1, %s24
      %p291 = scmp.lt.s32.totalorder %s24, 3
      %p292 = pnand %p290, %p291
      %p293 = pneg %p292
      // Predicated region
      $region41: #{tpu_custom_call.1} parent=5 // pred_check
        _
      $region42: #{tpu_custom_call.1} parent=5 // pred_check_branch
        %295 = sbr.rel (%p292) target = $region44
      $region43: #{tpu_custom_call.1} parent=5 // pred_region
        %s296 = ssub.s32 %s24, 1
        %s297 = sand.u32 %s63, 1
        %s298 = scalar_lea.sflag [#allocation5], %s297
        %s299 = sand.u32 %s63, 1
        %s300 = smul.addr %s299, 8
        %s301 = scalar_lea.vmem [#allocation4], %s300
        // Predicated region
        $region45: #{tpu_custom_call.1} parent=43 // pred_check
          %p302 = pneg %p76
        $region46: #{tpu_custom_call.1} parent=43 // pred_check_branch
          %304 = sbr.rel (%p302) target = $region48
        $region47: #{tpu_custom_call.1} parent=43 // pred_region
          %305 = dma.done %s298, 128
        $region48: #{tpu_custom_call.1} parent=43 // pred_fallthru
          _
        // Predicated region
        $region49: #{tpu_custom_call.1} parent=43 // pred_check
          %p306 = pneg %p123
        $region50: #{tpu_custom_call.1} parent=43 // pred_check_branch
          %308 = sbr.rel (%p306) target = $region52
        $region51: #{tpu_custom_call.1} parent=43 // pred_region
          %309 = dma.done [#allocation8], 512
        $region52: #{tpu_custom_call.1} parent=43 // pred_fallthru
          _
        %p310 = scmp.lt.s32.totalorder %s29, 1
        %s311 = scalar_select %p310, %s29, 1
        %s312 = smul.addr %s311, 2
        %s313 = smul.addr %s312, 2
        %s314 = scalar_lea.vmem %s0, %s313
        %p315 = pneg %p50
        %p316 = pneg %p47
        %s317 = sand.u32 %s63, 1
        %s318 = scalar_lea.sflag [#allocation5], %s317
        %s319 = sand.u32 %s63, 1
        %s320 = smul.addr %s319, 8
        %s321 = scalar_lea.vmem [#allocation4], %s320
        %p322 = pneg %p76
        %p323 = pneg %p73
        %p324 = scmp.lt.s32.totalorder %s29, 1
        %s325 = scalar_select %p324, %s29, 1
        %s326 = smul.addr %s325, 2
        %s327 = smul.addr %s326, 8
        %s328 = scalar_lea.vmem %s2, %s327
        %p329 = pneg %p102
        %p330 = pneg %p99
        %p331 = pneg %p123
        %p332 = pneg %p120
        %p333 = pneg %p144
        %p334 = pneg %p141
        %p335 = pneg %p165
        %p336 = pneg %p162
        %p337 = pneg %p191
        %p338 = pneg %p188
        %s339 = sand.u32 %s178, 1
        %s340 = scalar_lea.sflag [#allocation6], %s339
        %s341 = sand.u32 %s178, 1
        %s342 = smul.addr %s341, 16
        %s343 = scalar_lea.vmem [#allocation9], %s342
        %p344 = pneg %p217
        %p345 = pneg %p214
        %s346 = sand.u32 %s204, 1
        %s347 = scalar_lea.sflag [#allocation11], %s346
        %s348 = sand.u32 %s204, 1
        %s349 = smul.addr %s348, 16
        %s350 = scalar_lea.vmem [#allocation10], %s349
        %p351 = scmp.lt.s32.totalorder %s29, 1
        %s352 = scalar_select %p351, %s29, 1
        %s353 = smul.addr %s352, 2
        %s354 = smul.addr %s353, 2
        %s355 = scalar_lea.vmem %s0, %s354
        %p356 = scmp.lt.s32.totalorder %s29, 1
        %s357 = scalar_select %p356, %s29, 1
        %s358 = smul.addr %s357, 2
        %s359 = smul.addr %s358, 8
        %s360 = scalar_lea.vmem %s2, %s359
        %362 = vst [vmem:[#allocation2] sm:$0xff] 0
        %363 = vst [vmem:[#allocation2 + $0x18] sm:$0xff] 0
        %364 = vst [vmem:[#allocation2 + $0x8] sm:$0xc] 0
        %365 = vst [vmem:[#allocation2 + $0x10] sm:$0xc] 0
        %v366 = vld [vmem:[%s355] sm:$0xf]
        %v369 = vunpack.c.l.s4 1983009808
        %v370 = vunpack.c.0.s8 %v369
        %v371 = vlaneseq
        %v372 = vshrl.u32 %v371, 7
        %v373 = vsub.s32 %v370, %v372
        %v374 = vrot.slane %v366, %v373
        %v375 = vcombine.high %v374, %v374
        %378 = vst [vmem:[#allocation2 + $0x8] sm:$0x3] %v374
        %379 = vst [vmem:[#allocation2 + $0x10] sm:$0x3] %v375
        %v380 = vld [vmem:[%s301] sm:$0xff]
        %v382 = vunpack.c.l.b16 %v380
        %v383 = vunpack.c.h.b16 %v380
        %v384 = vpack.c.b16 %v382, %v382
        %v385 = vpack.c.b16 %v383, %v383
        %388 = vst [vmem:[#allocation2 + $0x8] sm:$0xf0] %v384
        %389 = vst [vmem:[#allocation2 + $0x10] sm:$0xf0] %v385
        %v390 = vld [vmem:[#allocation2] sm:$0xff]
        %v391 = vld [vmem:[#allocation2 + $0x8] sm:$0xff]
        %v392 = vld [vmem:[#allocation2 + $0x10] sm:$0xff]
        %v393 = vld [vmem:[#allocation2 + $0x18] sm:$0xff]
        %v394 = vld [vmem:[%s5] sm:$0x3]
        %v397 = vunpack.c.l.s4 1966171168
        %v398 = vunpack.c.0.s8 %v397
        %v399 = vlaneseq
        %v400 = vshrl.u32 %v399, 7
        %v401 = vsub.s32 %v398, %v400
        %v402 = vrot.slane %v394, %v401
        %v403 = vcombine.high %v402, %v402
        %v405 = vunpack.c.l.s4 1966171168
        %v406 = vunpack.c.0.s8 %v405
        %v407 = vlaneseq
        %v408 = vshrl.u32 %v407, 7
        %v409 = vsub.s32 %v406, %v408
        %v410 = vrot.slane %v402, %v409
        %v412 = vunpack.c.l.s4 1966171168
        %v413 = vunpack.c.0.s8 %v412
        %v414 = vlaneseq
        %v415 = vshrl.u32 %v414, 7
        %v416 = vsub.s32 %v413, %v415
        %v417 = vrot.slane %v403, %v416
        %v419 = vpack.i.b16 %v410, %v410
        %v421 = vlaneseq
        %v422 = vshrl.u32 %v421, 7
        %v423 = vsub.s32 0, %v422
        %v424 = vrot.slane %v419, %v423
        %v426 = vpack.i.b16 %v417, %v417
        %v428 = vlaneseq
        %v429 = vshrl.u32 %v428, 7
        %v430 = vsub.s32 0, %v429
        %v431 = vrot.slane %v426, %v430
        %434 = vrot.lane.b32.xlu0 %v424, 111
        %v435 = vpop.permute.xlu0 %434
        %436 = vrot.lane.b32.xlu0 %v431, 111
        %v437 = vpop.permute.xlu0 %436
        %vm438 = vcmask 908288
        %v439 = vsel %vm438, %v435, %v437
        %v443 = vmul.bf16 %v390, %v435
        %v444 = vmul.bf16 %v391, %v439
        %v445 = vmul.bf16 %v392, %v437
        %449 = vrot.lane.b32.xlu0 %v443, 17
        %v450 = vpop.permute.xlu0 %449
        %451 = vrot.lane.b32.xlu0 %v444, 17
        %v452 = vpop.permute.xlu0 %451
        %453 = vrot.lane.b32.xlu0 %v445, 17
        %v454 = vpop.permute.xlu0 %453
        %vm455 = vcmask 138240
        %v456 = vsel %vm455, %v450, %v452
        %v457 = vsel %vm455, %v452, %v454
        %460 = vst [vmem:[#allocation3] sm:$0xff] %v456
        %461 = vst [vmem:[#allocation3 + $0x8] sm:$0xff] %v457
        %465 = vrot.lane.b32.xlu0 %v390, 16
        %v466 = vpop.permute.xlu0 %465
        %467 = vrot.lane.b32.xlu0 %v391, 16
        %v468 = vpop.permute.xlu0 %467
        %469 = vrot.lane.b32.xlu0 %v392, 16
        %v470 = vpop.permute.xlu0 %469
        %vm471 = vcmask 130048
        %v472 = vsel %vm471, %v466, %v468
        %v473 = vsel %vm471, %v468, %v470
        %476 = vst [vmem:[#allocation3 + $0x10] sm:$0xff] %v472
        %477 = vst [vmem:[#allocation3 + $0x18] sm:$0xff] %v473
        %v478 = vshrl.u32 %v410, 16
        %v479 = vpack.i.b16 %v478, %v478
        %v481 = vlaneseq
        %v482 = vshrl.u32 %v481, 7
        %v483 = vsub.s32 0, %v482
        %v484 = vrot.slane %v479, %v483
        %v485 = vshrl.u32 %v417, 16
        %v486 = vpack.i.b16 %v485, %v485
        %v488 = vlaneseq
        %v489 = vshrl.u32 %v488, 7
        %v490 = vsub.s32 0, %v489
        %v491 = vrot.slane %v486, %v490
        %494 = vrot.lane.b32.xlu0 %v484, 113
        %v495 = vpop.permute.xlu0 %494
        %496 = vrot.lane.b32.xlu0 %v491, 113
        %v497 = vpop.permute.xlu0 %496
        %vm498 = vcmask 924672
        %v499 = vsel %vm498, %v495, %v497
        %v503 = vmul.bf16 %v390, %v495
        %v504 = vmul.bf16 %v391, %v499
        %v505 = vmul.bf16 %v392, %v497
        %509 = vrot.lane.b32.xlu0 %v503, 15
        %v510 = vpop.permute.xlu0 %509
        %511 = vrot.lane.b32.xlu0 %v504, 15
        %v512 = vpop.permute.xlu0 %511
        %513 = vrot.lane.b32.xlu0 %v505, 15
        %v514 = vpop.permute.xlu0 %513
        %vm515 = vcmask 121856
        %v516 = vsel %vm515, %v510, %v512
        %v517 = vsel %vm515, %v512, %v514
        %520 = vst [vmem:[#allocation3 + $0x20] sm:$0xff] %v516
        %521 = vst [vmem:[#allocation3 + $0x28] sm:$0xff] %v517
        %522 = vrot.lane.b32.xlu0 %v424, 127
        %v523 = vpop.permute.xlu0 %522
        %524 = vrot.lane.b32.xlu0 %v431, 127
        %v525 = vpop.permute.xlu0 %524
        %vm526 = vcmask 1039360
        %v527 = vsel %vm526, %v523, %v525
        %v531 = vmul.bf16 %v390, %v523
        %v532 = vmul.bf16 %v391, %v527
        %v533 = vmul.bf16 %v392, %v525
        %537 = vrot.lane.b32.xlu0 %v531, 1
        %v538 = vpop.permute.xlu0 %537
        %539 = vrot.lane.b32.xlu0 %v532, 1
        %v540 = vpop.permute.xlu0 %539
        %541 = vrot.lane.b32.xlu0 %v533, 1
        %v542 = vpop.permute.xlu0 %541
        %vm543 = vcmask 7168
        %v544 = vsel %vm543, %v538, %v540
        %v545 = vsel %vm543, %v540, %v542
        %548 = vst [vmem:[#allocation3 + $0x30] sm:$0xff] %v544
        %549 = vst [vmem:[#allocation3 + $0x38] sm:$0xff] %v545
        %550 = vst [vmem:[#allocation3 + $0x40] sm:$0xff] %v391
        %551 = vst [vmem:[#allocation3 + $0x48] sm:$0xff] %v392
        %552 = vrot.lane.b32.xlu0 %v484, 1
        %v553 = vpop.permute.xlu0 %552
        %554 = vrot.lane.b32.xlu0 %v491, 1
        %v555 = vpop.permute.xlu0 %554
        %v556 = vsel %vm543, %v553, %v555
        %v560 = vmul.bf16 %v391, %v553
        %v561 = vmul.bf16 %v392, %v556
        %v562 = vmul.bf16 %v393, %v555
        %566 = vrot.lane.b32.xlu0 %v560, 127
        %v567 = vpop.permute.xlu0 %566
        %568 = vrot.lane.b32.xlu0 %v561, 127
        %v569 = vpop.permute.xlu0 %568
        %570 = vrot.lane.b32.xlu0 %v562, 127
        %v571 = vpop.permute.xlu0 %570
        %v572 = vsel %vm526, %v567, %v569
        %v573 = vsel %vm526, %v569, %v571
        %576 = vst [vmem:[#allocation3 + $0x50] sm:$0xff] %v572
        %577 = vst [vmem:[#allocation3 + $0x58] sm:$0xff] %v573
        %578 = vrot.lane.b32.xlu0 %v424, 15
        %v579 = vpop.permute.xlu0 %578
        %580 = vrot.lane.b32.xlu0 %v431, 15
        %v581 = vpop.permute.xlu0 %580
        %v582 = vsel %vm515, %v579, %v581
        %v586 = vmul.bf16 %v391, %v579
        %v587 = vmul.bf16 %v392, %v582
        %v588 = vmul.bf16 %v393, %v581
        %592 = vrot.lane.b32.xlu0 %v586, 113
        %v593 = vpop.permute.xlu0 %592
        %594 = vrot.lane.b32.xlu0 %v587, 113
        %v595 = vpop.permute.xlu0 %594
        %596 = vrot.lane.b32.xlu0 %v588, 113
        %v597 = vpop.permute.xlu0 %596
        %v598 = vsel %vm498, %v593, %v595
        %v599 = vsel %vm498, %v595, %v597
        %602 = vst [vmem:[#allocation3 + $0x60] sm:$0xff] %v598
        %603 = vst [vmem:[#allocation3 + $0x68] sm:$0xff] %v599
        %605 = vrot.lane.b32.xlu0 %v391, 112
        %v606 = vpop.permute.xlu0 %605
        %607 = vrot.lane.b32.xlu0 %v392, 112
        %v608 = vpop.permute.xlu0 %607
        %609 = vrot.lane.b32.xlu0 %v393, 112
        %v610 = vpop.permute.xlu0 %609
        %vm611 = vcmask 916480
        %v612 = vsel %vm611, %v606, %v608
        %v613 = vsel %vm611, %v608, %v610
        %616 = vst [vmem:[#allocation3 + $0x70] sm:$0xff] %v612
        %617 = vst [vmem:[#allocation3 + $0x78] sm:$0xff] %v613
        %618 = vrot.lane.b32.xlu0 %v484, 17
        %v619 = vpop.permute.xlu0 %618
        %620 = vrot.lane.b32.xlu0 %v491, 17
        %v621 = vpop.permute.xlu0 %620
        %v622 = vsel %vm455, %v619, %v621
        %v626 = vmul.bf16 %v391, %v619
        %v627 = vmul.bf16 %v392, %v622
        %v628 = vmul.bf16 %v393, %v621
        %632 = vrot.lane.b32.xlu0 %v626, 111
        %v633 = vpop.permute.xlu0 %632
        %634 = vrot.lane.b32.xlu0 %v627, 111
        %v635 = vpop.permute.xlu0 %634
        %636 = vrot.lane.b32.xlu0 %v628, 111
        %v637 = vpop.permute.xlu0 %636
        %v638 = vsel %vm438, %v633, %v635
        %v639 = vsel %vm438, %v635, %v637
        %642 = vst [vmem:[#allocation3 + $0x80] sm:$0xff] %v638
        %643 = vst [vmem:[#allocation3 + $0x88] sm:$0xff] %v639
        %v644 = vld [vmem:[#allocation7] sm:$0xff]
        %v645 = vld [vmem:[#allocation7 + $0x8] sm:$0xff]
        %v646 = vld [vmem:[#allocation7 + $0x10] sm:$0xff]
        %v647 = vld [vmem:[#allocation7 + $0x18] sm:$0xff]
        %v648 = vld [vmem:[#allocation3] sm:$0xff]
        %v649 = vld [vmem:[#allocation3 + $0x8] sm:$0xff]
        %v650 = vld [vmem:[#allocation3 + $0x10] sm:$0xff]
        %v651 = vld [vmem:[#allocation3 + $0x18] sm:$0xff]
        %v652 = vld [vmem:[#allocation3 + $0x20] sm:$0xff]
        %v653 = vld [vmem:[#allocation3 + $0x28] sm:$0xff]
        %v654 = vld [vmem:[#allocation3 + $0x30] sm:$0xff]
        %v655 = vld [vmem:[#allocation3 + $0x38] sm:$0xff]
        %v656 = vld [vmem:[#allocation3 + $0x40] sm:$0xff]
        %v657 = vld [vmem:[#allocation3 + $0x48] sm:$0xff]
        %v658 = vld [vmem:[#allocation3 + $0x50] sm:$0xff]
        %v659 = vld [vmem:[#allocation3 + $0x58] sm:$0xff]
        %v660 = vld [vmem:[#allocation3 + $0x60] sm:$0xff]
        %v661 = vld [vmem:[#allocation3 + $0x68] sm:$0xff]
        %v662 = vld [vmem:[#allocation3 + $0x70] sm:$0xff]
        %v663 = vld [vmem:[#allocation3 + $0x78] sm:$0xff]
        %v664 = vld [vmem:[#allocation3 + $0x80] sm:$0xff]
        %v665 = vld [vmem:[#allocation3 + $0x88] sm:$0xff]
        %v666 = vld [vmem:[%s4] sm:$0xff]
        %v667 = vld [vmem:[%s4 + $0x8] sm:$0xff]
        %v668 = vld [vmem:[%s4 + $0x10] sm:$0xff]
        %v669 = vld [vmem:[%s4 + $0x18] sm:$0xff]
        %671 = vset.pattern.permute.xlu0 0
        %672 = vperm.xlu0 %671, %v666
        %v673 = vpop.permute.xlu0 %672
        %676 = vset.pattern.permute.xlu0 0
        %677 = vperm.xlu0 %676, %v667
        %v678 = vpop.permute.xlu0 %677
        %681 = vset.pattern.permute.xlu0 0
        %682 = vperm.xlu0 %681, %v668
        %v683 = vpop.permute.xlu0 %682
        %686 = vset.pattern.permute.xlu0 0
        %687 = vperm.xlu0 %686, %v669
        %v688 = vpop.permute.xlu0 %687
        %v694 = vunpack.c.l.b16 %v644
        %v695 = vunpack.c.h.b16 %v644
        %v696 = vunpack.c.l.b16 %v645
        %v697 = vunpack.c.h.b16 %v645
        %v698 = vunpack.c.l.b16 %v646
        %v699 = vunpack.c.h.b16 %v646
        %v700 = vunpack.c.l.b16 %v647
        %v701 = vunpack.c.h.b16 %v647
        %v702 = vpack.c.b16 %v696, %v694
        %v703 = vpack.c.b16 %v697, %v695
        %v704 = vpack.c.b16 %v700, %v698
        %v705 = vpack.c.b16 %v701, %v699
        %vm708 = vcmask 130048
        %v710 = vsel %vm708, %v703, 0
        %v713 = vsel %vm708, %v705, 0
        %715 = vmatprep.subr.bf16.mxu0 %v649
        %716 = vmatpush1.bf16.msra.mxu0 %v648
        %717 = vmatprep.subr.bf16.mxu0 %v651
        %718 = vmatpush1.bf16.msra.mxu0 %v650
        %719 = vmatprep.subr.bf16.mxu0 %v653
        %720 = vmatpush1.bf16.msra.mxu0 %v652
        %721 = vmatprep.subr.bf16.mxu0 %v655
        %722 = vmatpush1.bf16.msra.mxu0 %v654
        %723 = vmatprep.subr.bf16.mxu0 %v657
        %724 = vmatpush1.bf16.msra.mxu0 %v656
        %725 = vmatprep.subr.bf16.mxu0 %v659
        %726 = vmatpush1.bf16.msra.mxu0 %v658
        %727 = vmatprep.subr.bf16.mxu0 %v661
        %728 = vmatpush1.bf16.msra.mxu0 %v660
        %729 = vmatprep.subr.bf16.mxu0 %v663
        %730 = vmatpush1.bf16.msra.mxu0 %v662
        %731 = vmatprep.subr.bf16.mxu0 %v665
        %732 = vmatpush1.bf16.msra.mxu0 %v664
        %733 = vmatprep.subr.bf16.mxu0 0
        %734 = vmatpush1.bf16.msra.mxu0 0
        %735 = vmatprep.subr.bf16.mxu0 0
        %736 = vmatpush1.bf16.msra.mxu0 0
        %737 = vmatprep.subr.bf16.mxu0 0
        %738 = vmatpush1.bf16.msra.mxu0 0
        %739 = vmatprep.subr.bf16.mxu0 0
        %740 = vmatpush1.bf16.msra.mxu0 0
        %741 = vmatprep.subr.bf16.mxu0 0
        %742 = vmatpush1.bf16.msra.mxu0 0
        %743 = vmatprep.subr.bf16.mxu0 0
        %744 = vmatpush1.bf16.msra.mxu0 0
        %745 = vmatprep.subr.bf16.mxu0 0
        %746 = vmatpush1.bf16.msra.mxu0 0
        %747 = vmatprep.mubr.bf16.mxu0 %v710
        %748 = vmatmul.mubr.bf16.gmra.mrb[0].mxu0 %v702
        %v749 = vpop.f32.mrb[0].mxu0
        %v750 = vadd.f32 %v673, %v749
        %v751 = vpop.f32.mrb[0].mxu0
        %v752 = vadd.f32 %v673, %v751
        %v753 = vpop.f32.mrb[0].mxu0
        %v754 = vadd.f32 %v678, %v753
        %v755 = vpop.f32.mrb[0].mxu0
        %v756 = vadd.f32 %v678, %v755
        %757 = vmatprep.mubr.bf16.mxu0 %v713
        %758 = vmatmul.mubr.bf16.gmra.mrb[0].mxu0 %v704
        %v759 = vpop.f32.mrb[0].mxu0
        %v760 = vadd.f32 %v683, %v759
        %v761 = vpop.f32.mrb[0].mxu0
        %v762 = vadd.f32 %v683, %v761
        %v763 = vpop.f32.mrb[0].mxu0
        %v764 = vadd.f32 %v688, %v763
        %v765 = vpop.f32.mrb[0].mxu0
        %v766 = vadd.f32 %v688, %v765
        %767 = vdwg.mxu0
        %v768 = vld [vmem:[%s360] sm:$0xff]
        %v769 = vld [vmem:[%s360 + $0x8] sm:$0xff]
        %v770 = vxor.u32 %v760, 2147483648
        %v771 = vxor.u32 %v762, 2147483648
        %v772 = vmul.f32 %v770, 1.442695
        %v773 = vpow.pop %v772
        %v774 = vmul.f32 %v771, 1.442695
        %v775 = vpow.pop %v774
        %v776 = vadd.f32 %v773, 1.0
        %v777 = vadd.f32 %v775, 1.0
        %v778 = vrcp.pop %v776
        %v779 = vmul.f32 1.0, %v778
        %v780 = vrcp.pop %v777
        %v781 = vmul.f32 1.0, %v780
        %v782 = vmul.f32 %v768, %v779
        %v783 = vmul.f32 %v769, %v781
        %v784 = vxor.u32 %v750, 2147483648
        %v785 = vxor.u32 %v752, 2147483648
        %v786 = vmul.f32 %v784, 1.442695
        %v787 = vpow.pop %v786
        %v788 = vmul.f32 %v785, 1.442695
        %v789 = vpow.pop %v788
        %v790 = vadd.f32 %v787, 1.0
        %v791 = vadd.f32 %v789, 1.0
        %v792 = vrcp.pop %v790
        %v793 = vmul.f32 1.0, %v792
        %v794 = vrcp.pop %v791
        %v795 = vmul.f32 1.0, %v794
        %v796 = vtanh.pop %v754
        %v797 = vtanh.pop %v756
        %v798 = vmul.f32 %v793, %v796
        %v799 = vmul.f32 %v795, %v797
        %v800 = vadd.f32 %v782, %v798
        %v801 = vadd.f32 %v783, %v799
        %v802 = vtanh.pop %v800
        %v803 = vtanh.pop %v801
        %v804 = vxor.u32 %v764, 2147483648
        %v805 = vxor.u32 %v766, 2147483648
        %v806 = vmul.f32 %v804, 1.442695
        %v807 = vpow.pop %v806
        %v808 = vmul.f32 %v805, 1.442695
        %v809 = vpow.pop %v808
        %v810 = vadd.f32 %v807, 1.0
        %v811 = vadd.f32 %v809, 1.0
        %v812 = vrcp.pop %v810
        %v813 = vmul.f32 1.0, %v812
        %v814 = vrcp.pop %v811
        %v815 = vmul.f32 1.0, %v814
        %v816 = vmul.f32 %v802, %v813
        %v817 = vmul.f32 %v803, %v815
        %818 = vst [vmem:[%s343] sm:$0xff] %v800
        %819 = vst [vmem:[%s343 + $0x8] sm:$0xff] %v801
        %820 = vst [vmem:[%s350] sm:$0xff] %v816
        %821 = vst [vmem:[%s350 + $0x8] sm:$0xff] %v817
        %s822 = sand.u32 %s178, 1
        %s823 = scalar_lea.sflag [#allocation6], %s822
        %s824 = sand.u32 %s178, 1
        %s825 = smul.addr %s824, 16
        %s826 = scalar_lea.vmem [#allocation9], %s825
        %s827 = sand.u32 %s204, 1
        %s828 = scalar_lea.sflag [#allocation11], %s827
        %s829 = sand.u32 %s204, 1
        %s830 = smul.addr %s829, 16
        %s831 = scalar_lea.vmem [#allocation10], %s830
        // Predicated region
        $region53: #{tpu_custom_call.1} parent=43 // pred_check
          %p832 = pneg %p188
        $region54: #{tpu_custom_call.1} parent=43 // pred_check_branch
          %834 = sbr.rel (%p832) target = $region56
        $region55: #{tpu_custom_call.1} parent=43 // pred_region
          %s836 = ssub.s32 256, 256
          %837 = vsyncadd %s823, %s836
          %s838 = smul.addr %s29, 2
          %s839 = smul.addr %s838, 128
          %s840 = scalar_lea.hbm %s6, %s839
          %s842 = sshll.u32 %s826, 4
          %s843 = int_to_ptr.vmem [resolvable:$true] %s842
          %845 = dma.vmem_to_hbm [thread:$0]  %s843, 256, %s840, %s823
        $region56: #{tpu_custom_call.1} parent=43 // pred_fallthru
          _
        // Predicated region
        $region57: #{tpu_custom_call.1} parent=43 // pred_check
          %p846 = pneg %p214
        $region58: #{tpu_custom_call.1} parent=43 // pred_check_branch
          %848 = sbr.rel (%p846) target = $region60
        $region59: #{tpu_custom_call.1} parent=43 // pred_region
          %s850 = ssub.s32 256, 256
          %851 = vsyncadd %s828, %s850
          %s852 = smul.addr %s29, 2
          %s853 = smul.addr %s852, 128
          %s854 = scalar_lea.hbm %s7, %s853
          %s856 = sshll.u32 %s831, 4
          %s857 = int_to_ptr.vmem [resolvable:$true] %s856
          %859 = dma.vmem_to_hbm [thread:$0]  %s857, 256, %s854, %s828
        $region60: #{tpu_custom_call.1} parent=43 // pred_fallthru
          _
      $region44: #{tpu_custom_call.1} parent=5 // pred_fallthru
        _
      %p860 = scmp.le.s32.totalorder 2, %s24
      // Predicated region
      $region61: #{tpu_custom_call.1} parent=5 // pred_check
        %p861 = pneg %p860
      $region62: #{tpu_custom_call.1} parent=5 // pred_check_branch
        %863 = sbr.rel (%p861) target = $region64
      $region63: #{tpu_custom_call.1} parent=5 // pred_region
        %s864 = ssub.s32 %s24, 2
        // Predicated region
        $region65: #{tpu_custom_call.1} parent=63 // pred_check
          %p865 = pneg %p194
        $region66: #{tpu_custom_call.1} parent=63 // pred_check_branch
          %867 = sbr.rel (%p865) target = $region68
        $region67: #{tpu_custom_call.1} parent=63 // pred_region
          %s868 = sand.u32 %s179, 1
          %s869 = scalar_lea.sflag [#allocation6], %s868
          %s870 = sand.u32 %s179, 1
          %s871 = smul.addr %s870, 16
          %s872 = scalar_lea.vmem [#allocation9], %s871
          %873 = dma.done %s869, 256
        $region68: #{tpu_custom_call.1} parent=63 // pred_fallthru
          _
        // Predicated region
        $region69: #{tpu_custom_call.1} parent=63 // pred_check
          %p874 = pneg %p220
        $region70: #{tpu_custom_call.1} parent=63 // pred_check_branch
          %876 = sbr.rel (%p874) target = $region72
        $region71: #{tpu_custom_call.1} parent=63 // pred_region
          %s877 = sand.u32 %s205, 1
          %s878 = scalar_lea.sflag [#allocation11], %s877
          %s879 = sand.u32 %s205, 1
          %s880 = smul.addr %s879, 16
          %s881 = scalar_lea.vmem [#allocation10], %s880
          %882 = dma.done %s878, 256
        $region72: #{tpu_custom_call.1} parent=63 // pred_fallthru
          _
      $region64: #{tpu_custom_call.1} parent=5 // pred_fallthru
        _
    $region6: #{tpu_custom_call.1} parent=1 // loop_footer
      %s28 = sadd.s32 1, %s24
    $region7: #{tpu_custom_call.1} parent=1 // loop_footer_branch
      %23 = sbr.rel target = $region3
    $region8: #{tpu_custom_call.1} parent=1 // loop_exit
      _
    %883 = vsyncpa [#allocation5], 1
    %s884 = scalar_lea.sflag [#allocation5], 1
    %885 = vsyncpa %s884, 1
    %886 = vsyncpa [#allocation8], 1
    %887 = vsyncpa [#allocation6], 1
    %s888 = scalar_lea.sflag [#allocation6], 1
    %889 = vsyncpa %s888, 1
    %890 = vsyncpa [#allocation11], 1
    %s891 = scalar_lea.sflag [#allocation11], 1
    %892 = vsyncpa %s891, 1

</llo_original>
